<compile_context>
chip_gen: v5e
topology: v5e:2x2
jax: 0.10.0
libtpu: 0.0.40
codegen_flags: <defaults>
</compile_context>

<pallas_src>
import functools
import math

import jax
import jax.numpy as jnp
from jax.experimental import pallas as pl
from jax.experimental.pallas import tpu as pltpu


# --------------------------------------------------------------------------- #
# Kernel: per-row logsumexp over the off-diagonal, exponentiated similarity.
# Grid = (num_row_blocks, num_col_blocks); columns (innermost, "arbitrary") are
# the reduction axis with a resident per-row accumulator; rows are "parallel".
# --------------------------------------------------------------------------- #
def _simclr_lse_kernel(rowf_ref, colf_ref, out_ref, acc_ref, *maybe_m,
                       temperature: float, n_valid: int, n_pad: int,
                       tile_r: int, tile_c: int, use_const_max: bool):
    r = pl.program_id(0)
    c = pl.program_id(1)
    num_c = pl.num_programs(1)

    pad = n_pad - n_valid                                   # compile-time int
    neg_init = jnp.float32(-1e30)
    # Analytic row max of e = exp(s): rows have norm 1/sqrt(tau) -> s_ii = 1/tau.
    max_logit = math.exp(1.0 / temperature) if use_const_max else 0.0
    m_ref = maybe_m[0] if maybe_m else None                 # online path only

    # ---- per-row-block init (start of the column sweep) ----
    @pl.when(c == 0)
    def _init():
        acc_ref[...] = jnp.zeros(acc_ref.shape, acc_ref.dtype)
        if m_ref is not None:
            m_ref[...] = jnp.full(m_ref.shape, neg_init, m_ref.dtype)

    # ---- similarity tile on the MXU (1/tau already folded into the features) ----
    s = jax.lax.dot_general(rowf_ref[...], colf_ref[...],
                            (((1,), (1,)), ((), ())),
                            preferred_element_type=jnp.float32)   # (Tr, Tc)
    e = jnp.exp(s)            # reference's "logits" (intentional double exp)

    if use_const_max:
        # e <= exp(1/tau) = max_logit exactly (unit-norm rows) -> stable without a
        # row max; diagonal removed analytically at finalize (no iota masking).
        acc_ref[...] += jnp.sum(jnp.exp(e - max_logit), axis=-1, keepdims=True)
    else:
        # Small-tau fallback: online (flash-style) running row max.  The diagonal
        # must be excluded from the max (it would poison it), via a cheap
        # global-index mask.  This path is only traced when temperature < 0.25.
        rg = r * tile_r + jax.lax.broadcasted_iota(jnp.int32, e.shape, 0)
        cg = c * tile_c + jax.lax.broadcasted_iota(jnp.int32, e.shape, 1)
        v = jnp.where(rg == cg, neg_init, e)
        m_prev = m_ref[...]
        m_new = jnp.maximum(m_prev, jnp.max(v, axis=-1, keepdims=True))
        acc_ref[...] = (acc_ref[...] * jnp.exp(m_prev - m_new)
                        + jnp.sum(jnp.exp(v - m_new), axis=-1, keepdims=True))
        m_ref[...] = m_new

    # ---- finalize per-row logsumexp at the end of the column sweep ----
    @pl.when(c == num_c - 1)
    def _finalize():
        acc = acc_ref[...]
        if use_const_max:
            # Remove the diagonal term (exp(e_ii - max_logit) == 1) and the
            # zero-padded columns (each contributes exp(exp(0) - max_logit)).
            corr = 1.0 + pad * math.exp(1.0 - max_logit)
            lse = max_logit + jnp.log(acc - corr)
        else:
            m = m_ref[...]
            if pad:
                acc = acc - pad * jnp.exp(1.0 - m)          # padded cols: e == 1
            lse = m + jnp.log(acc)
        # TODO(synk): lane-dense (1, tile_r) output layout if this kernel is ever
        # fused downstream; (tile_r, 1) keeps masked 1-wide stores but is simplest.
        out_ref[...] = lse.astype(out_ref.dtype)


# --------------------------------------------------------------------------- #
# Tiling helpers.
# --------------------------------------------------------------------------- #
def _round_up(x: int, m: int) -> int:
    return ((x + m - 1) // m) * m


def _pow2_tile(limit: int, mult: int, cap: int) -> int:
    """Largest mult * 2^k <= min(limit, cap); at least mult."""
    t = mult
    while t * 2 <= min(limit, cap):
        t *= 2
    return t


# --------------------------------------------------------------------------- #
# Wrapper.
# --------------------------------------------------------------------------- #
def simclr_loss(features1: jax.Array, features2: jax.Array,
                temperature: float = 0.5, *, matmul_dtype=None) -> jax.Array:
    """Pallas TPU implementation of SimCLRLoss.forward (n_aug=2)."""
    assert features1.shape == features2.shape and features1.ndim == 2
    batch_size, dim = features1.shape
    n = 2 * batch_size
    temperature = float(temperature)

    # ---- O(N*D) wrapper glue: normalize once, fold 1/sqrt(tau), positives ----
    f = jnp.concatenate([features1, features2], axis=0).astype(jnp.float32)
    fn = f * (jax.lax.rsqrt(jnp.sum(f * f, axis=1, keepdims=True))
              / jnp.sqrt(jnp.float32(temperature)))          # rows: norm 1/sqrt(tau)
    # positive_i = exp( s[i, (i+B) mod 2B] ) -- an O(N*D) roll + row-dot.
    pos = jnp.exp(jnp.sum(fn * jnp.roll(fn, -batch_size, axis=0), axis=1))

    # ---- MXU operand dtype (bf16 gated on tau: double exp amplifies rounding) ----
    if matmul_dtype is None:
        use_bf16 = (features1.dtype == jnp.bfloat16) and temperature >= 0.3
        compute_dtype = jnp.bfloat16 if use_bf16 else jnp.float32
    else:
        compute_dtype = jnp.dtype(matmul_dtype)
    itemsize = jnp.dtype(compute_dtype).itemsize
    mult = 16 if compute_dtype == jnp.bfloat16 else 8        # sublane quantum

    # ---- generation-aware VMEM budget & tile caps ----
    try:
        vmem_cap = int(getattr(pltpu.get_tpu_info(), "vmem_capacity_bytes",
                               64 * 1024 * 1024))
    except Exception:                                        # emulator / unknown
        vmem_cap = 64 * 1024 * 1024
    vmem_limit = min(int(vmem_cap * 0.6), 96 * 1024 * 1024)  # ~38 MiB v7x, ~77 MiB v5e/v6e
    big_vmem = vmem_cap >= 100 * 1024 * 1024                 # v5e / v6e (128 MiB)
    cap_r = 1024 if big_vmem else 512
    cap_c = 512

    n_up = _round_up(n, mult)
    # Keep >= 2 row blocks whenever possible (v7x has 2 TensorCores per chip).
    tile_r = _pow2_tile(max(mult, n_up // 2), mult, cap_r)
    tile_c = _pow2_tile(n_up, mult, cap_c)

    def _vmem_est(tr, tc):
        return (2 * tr * dim * itemsize         # row feature block (double-buffered)
                + 2 * tc * dim * itemsize       # col feature block (double-buffered)
                + 4 * tr * tc * 4               # (Tr,Tc) f32 temporaries (s/e/p + slack)
                + 8 * tr * 4)                   # scratch + output
    while tile_r > mult and _vmem_est(tile_r, tile_c) > 0.7 * vmem_limit:
        tile_r //= 2
    while tile_c > mult and _vmem_est(tile_r, tile_c) > 0.7 * vmem_limit:
        tile_c //= 2

    # Zero-pad (after normalization) so both tiles divide the padded extent;
    # padded rows/columns are removed analytically / sliced out below.
    n_pad = _round_up(n, max(tile_r, tile_c))
    pad = n_pad - n
    fn_dev = fn if pad == 0 else jnp.pad(fn, ((0, pad), (0, 0)))
    fn_dev = fn_dev.astype(compute_dtype)

    num_r = n_pad // tile_r
    num_c = n_pad // tile_c

    # Constant analytic max is safe (no full-row underflow in f32) for tau >= 0.25;
    # below that, fall back to the online running row max.
    use_const_max = temperature >= 0.25

    kernel = functools.partial(
        _simclr_lse_kernel, temperature=temperature, n_valid=int(n),
        n_pad=int(n_pad), tile_r=int(tile_r), tile_c=int(tile_c),
        use_const_max=use_const_max)

    scratch = [pltpu.VMEM((tile_r, 1), jnp.float32)]          # acc: running row sum
    if not use_const_max:
        scratch.append(pltpu.VMEM((tile_r, 1), jnp.float32))  # m: running row max

    cost = pl.CostEstimate(
        flops=int(2 * n_pad * n_pad * dim + 8 * n_pad * n_pad),
        transcendentals=int(2 * n_pad * n_pad + 2 * n_pad),
        bytes_accessed=int(itemsize * n_pad * dim * (num_r + 1) + 4 * n_pad))

    lse = pl.pallas_call(
        kernel,
        out_shape=jax.ShapeDtypeStruct((n_pad, 1), jnp.float32),
        grid_spec=pltpu.PrefetchScalarGridSpec(
            num_scalar_prefetch=0,
            grid=(num_r, num_c),
            in_specs=[pl.BlockSpec((tile_r, dim), lambda r, c: (r, 0)),   # row feats
                      pl.BlockSpec((tile_c, dim), lambda r, c: (c, 0))],  # col feats
            out_specs=pl.BlockSpec((tile_r, 1), lambda r, c: (r, 0)),
            scratch_shapes=scratch),
        compiler_params=pltpu.CompilerParams(
            dimension_semantics=("parallel", "arbitrary"),
            vmem_limit_bytes=vmem_limit),
        cost_estimate=cost,
    )(fn_dev, fn_dev)

    # Tiny O(N) epilogue (padded rows sliced out before the mean).
    return jnp.mean(lse[:n, 0] - pos)


# --------------------------------------------------------------------------- #
# Pure-JAX reference mirroring the PyTorch code (for validation).
# --------------------------------------------------------------------------- #
def _simclr_loss_ref(features1, features2, temperature=0.5):
    b = features1.shape[0]
    f1 = features1 / jnp.linalg.norm(features1, axis=1, keepdims=True)
    f2 = features2 / jnp.linalg.norm(features2, axis=1, keepdims=True)
    f = jnp.concatenate([f1, f2], axis=0)
    n = 2 * b
    sim = jnp.exp(f @ f.T / temperature)
    idx = jnp.arange(n)
    pos = sim[idx, (idx + b) % n]                            # (2B,)
    off = jnp.where(jnp.eye(n, dtype=bool), -jnp.inf, sim)
    lse = jax.scipy.special.logsumexp(off, axis=1)           # (2B,)
    return jnp.mean(lse - pos)


if __name__ == "__main__":
    key = jax.random.PRNGKey(0)
    k1, k2 = jax.random.split(key)

    # Main config: B=64, D=32 -> const-max path, tiled grid, f32 MXU.
    B, D = 64, 32
    f1 = jax.random.normal(k1, (B, D), dtype=jnp.float32)
    f2 = jax.random.normal(k2, (B, D), dtype=jnp.float32)

    loss = simclr_loss(f1, f2, temperature=0.5)
    jax.block_until_ready(loss)
    ref = _simclr_loss_ref(f1, f2, 0.5)
    assert jnp.allclose(loss, ref, rtol=1e-4, atol=1e-4), (loss, ref)

    # Online (flash-style running max) fallback for small temperature.
    loss2 = simclr_loss(f1, f2, temperature=0.2)
    ref2 = _simclr_loss_ref(f1, f2, 0.2)
    assert jnp.allclose(loss2, ref2, rtol=1e-4, atol=1e-4), (loss2, ref2)

    # Odd batch size -> zero-padded tiled path (monolithic fallback removed).
    Bs = 5
    g1 = jax.random.normal(k1, (Bs, D), dtype=jnp.float32)
    g2 = jax.random.normal(k2, (Bs, D), dtype=jnp.float32)
    loss3 = simclr_loss(g1, g2, temperature=0.5)
    ref3 = _simclr_loss_ref(g1, g2, 0.5)
    assert jnp.allclose(loss3, ref3, rtol=1e-4, atol=1e-4), (loss3, ref3)

    loss4 = simclr_loss(g1, g2, temperature=0.1)
    ref4 = _simclr_loss_ref(g1, g2, 0.1)
    assert jnp.allclose(loss4, ref4, rtol=1e-4, atol=1e-4), (loss4, ref4)

    # Opt-in bf16 MXU operands (looser tolerance: the double exp amplifies error).
    loss5 = simclr_loss(f1, f2, temperature=0.5, matmul_dtype=jnp.bfloat16)
    assert jnp.abs(loss5 - ref) < 0.5, (loss5, ref)

    jax.block_until_ready((loss, loss2, loss3, loss4, loss5))
    print("KERNEL_OK")
</pallas_src>

<mosaic_0001>
module attributes {stable_mosaic.version = 11 : i64} {
  func.func @_simclr_lse_kernel(%arg0: i32, %arg1: i32, %arg2: memref<64x32xf32, #tpu.memory_space<vmem>>, %arg3: memref<128x32xf32, #tpu.memory_space<vmem>>, %arg4: memref<64x1xf32, #tpu.memory_space<vmem>>, %arg5: memref<64x1xf32, #tpu.memory_space<vmem>>) attributes {dimension_semantics = [#tpu.dimension_semantics<parallel>, #tpu.dimension_semantics<arbitrary>], iteration_bounds = array<i64: 2, 1>, scalar_prefetch = 0 : i64, scratch_operands = 1 : i64, tpu.core_type = #tpu.core_type<tc>, window_params = [{transform_indices = @transform_0, window_bounds = array<i64: 64, 32>}, {transform_indices = @transform_1, window_bounds = array<i64: 128, 32>}, {transform_indices = @transform_2, window_bounds = array<i64: 64, 1>}]} {
    %c0_i32 = arith.constant 0 : i32
    %0 = arith.cmpi eq, %arg1, %c0_i32 : i32
    %1 = arith.extui %0 : i1 to i32
    %c0_i32_0 = arith.constant 0 : i32
    %2 = arith.cmpi ne, %1, %c0_i32_0 : i32
    scf.if %2 {
      %cst_12 = arith.constant 0.000000e+00 : f32
      %18 = vector.broadcast %cst_12 : f32 to vector<64x1xf32>
      %c0_13 = arith.constant 0 : index
      %c0_14 = arith.constant 0 : index
      %19 = vector.load %arg5[%c0_13, %c0_14] : memref<64x1xf32, #tpu.memory_space<vmem>>, vector<64x1xf32>
      tpu.vector_store %arg5[%c0_13, %c0_14], %18 {strides = array<i32>} : memref<64x1xf32, #tpu.memory_space<vmem>>, vector<64x1xf32>,
    } else {
    }
    %c0 = arith.constant 0 : index
    %c0_1 = arith.constant 0 : index
    %3 = vector.load %arg2[%c0, %c0_1] : memref<64x32xf32, #tpu.memory_space<vmem>>, vector<64x32xf32>
    %c0_2 = arith.constant 0 : index
    %c0_3 = arith.constant 0 : index
    %4 = vector.load %arg3[%c0_2, %c0_3] : memref<128x32xf32, #tpu.memory_space<vmem>>, vector<128x32xf32>
    %cst = arith.constant dense<0.000000e+00> : vector<64x128xf32>
    %5 = tpu.matmul %3, %4, %cst {dimension_numbers = #tpu.dot_dimension_numbers<[1], [1], [0], [0], [0, 0, 1, 0], [], []>} : vector<64x32xf32>, vector<128x32xf32>, vector<64x128xf32> -> vector<64x128xf32>
    %6 = math.exp %5 : vector<64x128xf32>
    %c0_4 = arith.constant 0 : index
    %c0_5 = arith.constant 0 : index
    %7 = vector.load %arg5[%c0_4, %c0_5] : memref<64x1xf32, #tpu.memory_space<vmem>>, vector<64x1xf32>
    %cst_6 = arith.constant 7.3890562 : f32
    %8 = vector.broadcast %cst_6 : f32 to vector<64x128xf32>
    %9 = arith.subf %6, %8 : vector<64x128xf32>
    %10 = math.exp %9 : vector<64x128xf32>
    %cst_7 = arith.constant dense<0.000000e+00> : vector<64xf32>
    %11 = vector.multi_reduction <add>, %10, %cst_7 [1] : vector<64x128xf32> to vector<64xf32>
    %12 = vector.shape_cast %11 : vector<64xf32> to vector<64x1xf32>
    %13 = arith.addf %7, %12 : vector<64x1xf32>
    %c0_8 = arith.constant 0 : index
    %c0_9 = arith.constant 0 : index
    %14 = vector.load %arg5[%c0_8, %c0_9] : memref<64x1xf32, #tpu.memory_space<vmem>>, vector<64x1xf32>
    tpu.vector_store %arg5[%c0_8, %c0_9], %13 {strides = array<i32>} : memref<64x1xf32, #tpu.memory_space<vmem>>, vector<64x1xf32>,
    %c0_i32_10 = arith.constant 0 : i32
    %15 = arith.cmpi eq, %arg1, %c0_i32_10 : i32
    %16 = arith.extui %15 : i1 to i32
    %c0_i32_11 = arith.constant 0 : i32
    %17 = arith.cmpi ne, %16, %c0_i32_11 : i32
    scf.if %17 {
      %c0_12 = arith.constant 0 : index
      %c0_13 = arith.constant 0 : index
      %18 = vector.load %arg5[%c0_12, %c0_13] : memref<64x1xf32, #tpu.memory_space<vmem>>, vector<64x1xf32>
      %cst_14 = arith.constant 1.000000e+00 : f32
      %19 = vector.broadcast %cst_14 : f32 to vector<64x1xf32>
      %20 = arith.subf %18, %19 : vector<64x1xf32>
      %21 = math.log %20 : vector<64x1xf32>
      %cst_15 = arith.constant 7.3890562 : f32
      %22 = vector.broadcast %cst_15 : f32 to vector<64x1xf32>
      %23 = arith.addf %22, %21 : vector<64x1xf32>
      %c0_16 = arith.constant 0 : index
      %c0_17 = arith.constant 0 : index
      %24 = vector.load %arg4[%c0_16, %c0_17] : memref<64x1xf32, #tpu.memory_space<vmem>>, vector<64x1xf32>
      tpu.vector_store %arg4[%c0_16, %c0_17], %23 {strides = array<i32>} : memref<64x1xf32, #tpu.memory_space<vmem>>, vector<64x1xf32>,
    } else {
    }
    return
  }
  func.func @transform_0(%arg0: i32, %arg1: i32) -> (i32, i32) {
    %c0_i32 = arith.constant 0 : i32
    %c0_i32_0 = arith.constant 0 : i32
    return %arg0, %c0_i32 : i32, i32
  }
  func.func @transform_1(%arg0: i32, %arg1: i32) -> (i32, i32) {
    %c0_i32 = arith.constant 0 : i32
    %c0_i32_0 = arith.constant 0 : i32
    return %arg1, %c0_i32 : i32, i32
  }
  func.func @transform_2(%arg0: i32, %arg1: i32) -> (i32, i32) {
    %c0_i32 = arith.constant 0 : i32
    %c0_i32_0 = arith.constant 0 : i32
    return %arg0, %c0_i32 : i32, i32
  }
}

</mosaic_0001>

<llo_original>
// kernel: tpu_custom_call.1
$region0: #{tpu_custom_call.1}
  #allocation0 [shape = 'u32[]', space=smem, size = 0x4, offset = 0x4, fixed_abs, tag = 'smem constant byte address 0x4 - core index']
  #allocation1 [shape = 'u32[72,128]{1,0:T(1,128)}', space=vmem, size = 0x9000, scoped, tag = 'internal scratch']
  #allocation2 [shape = 'f32[64,1]{1,0:T(8,128)}', space=vmem, size = 0x8000, scoped, tag = 'scratch operand']
  %s0 = inlined_call_operand.vmem [shape: f32[128,32], index: 0, kind: input, shape index: {}]
  %s1 = inlined_call_operand.vmem [shape: f32[128,32], index: 1, kind: input, shape index: {}]
  %s2 = inlined_call_operand.vmem [shape: f32[128,1], index: 2, kind: output, shape index: {}]
  %s3 = sld [smem:[#allocation0]]
  $region49: #{tpu_custom_call.1} parent=0
    _
  %s5 = ssub.s32 1, %s3
  %s6 = scalar_select 0, %s5, %s3
  loop: start=0, step=1, limit=4
  $region2: #{tpu_custom_call.1} parent=0 // loop_pre_header
    _
  $region3: #{tpu_custom_call.1} parent=0 // loop_header
    %s8 = sphi 0, %s12
    %p9 = scmp.ge.s32.totalorder %s8, 4
    %s15 = sphi 0, %s27
    %s16 = sphi 0, %s23
    %s17 = sphi 0, %s15
    %s18 = sphi 0, %s16
    %s19 = sphi 0, %s17
    %s20 = sphi 0, %s18
    %s30 = sphi 0, %s32
    %s33 = sphi 0, %s30
    %s34 = sphi 0, %s33
    %s50 = sphi 0, %s34
    %s56 = sphi 0, %s58
    %s59 = sphi 0, %s56
    %s60 = sphi 0, %s59
    %s76 = sphi 0, %s60
    %s82 = sphi 0, %s84
    %s85 = sphi 0, %s82
    %s86 = sphi 0, %s85
    %s102 = sphi 0, %s86
  $region4: #{tpu_custom_call.1} parent=0 // loop_header_branch
    %11 = sbr.rel (%p9) target = $region8
  $region5: #{tpu_custom_call.1} parent=0 // loop_body
    %s13 = ssub.s32 %s8, 1
    %s14 = ssub.s32 %s8, 2
    %s21 = sadd.s32 1, %s16
    %p22 = scmp.ge.s32.totalorder %s21, 1
    %s23 = scalar_select %p22, 0, %s21
    %s24 = sadd.s32 1, %s15
    %s25 = scalar_select %p22, %s24, %s15
    %p26 = scmp.ge.s32.totalorder %s25, 2
    %s27 = scalar_select %p26, 0, %s25
    %s28 = ssub.s32 %s15, %s27
    %p29 = scmp.eq.s32.totalorder %s28, 0
    %s31 = sadd.s32 %s30, 1
    %s32 = scalar_select %p29, %s30, %s31
    %p35 = pneg %p29
    %p36 = scmp.eq.s32.totalorder %s8, 1
    %p37 = por %p35, %p36
    %p38 = scmp.ne.s32.totalorder %s30, %s33
    %p39 = scmp.eq.s32.totalorder %s8, 0
    %p40 = por %p38, %p39
    %p41 = scmp.ne.s32.totalorder %s30, %s33
    %p42 = scmp.eq.s32.totalorder %s13, 1
    %p43 = por %p41, %p42
    %p44 = scmp.ne.s32.totalorder %s33, %s34
    %p45 = scmp.eq.s32.totalorder %s13, 0
    %p46 = por %p44, %p45
    %p47 = scmp.ne.s32.totalorder %s33, %s34
    %p48 = scmp.eq.s32.totalorder %s14, 1
    %p49 = por %p47, %p48
    %p51 = scmp.ne.s32.totalorder %s34, %s50
    %p52 = scmp.eq.s32.totalorder %s14, 0
    %p53 = por %p51, %p52
    %s54 = ssub.s32 %s16, %s23
    %p55 = scmp.eq.s32.totalorder %s54, 0
    %s57 = sadd.s32 %s56, 1
    %s58 = scalar_select %p55, %s56, %s57
    %p61 = pneg %p55
    %p62 = scmp.eq.s32.totalorder %s8, 1
    %p63 = por %p61, %p62
    %p64 = scmp.ne.s32.totalorder %s56, %s59
    %p65 = scmp.eq.s32.totalorder %s8, 0
    %p66 = por %p64, %p65
    %p67 = scmp.ne.s32.totalorder %s56, %s59
    %p68 = scmp.eq.s32.totalorder %s13, 1
    %p69 = por %p67, %p68
    %p70 = scmp.ne.s32.totalorder %s59, %s60
    %p71 = scmp.eq.s32.totalorder %s13, 0
    %p72 = por %p70, %p71
    %p73 = scmp.ne.s32.totalorder %s59, %s60
    %p74 = scmp.eq.s32.totalorder %s14, 1
    %p75 = por %p73, %p74
    %p77 = scmp.ne.s32.totalorder %s60, %s76
    %p78 = scmp.eq.s32.totalorder %s14, 0
    %p79 = por %p77, %p78
    %s80 = ssub.s32 %s15, %s27
    %p81 = scmp.eq.s32.totalorder %s80, 0
    %s83 = sadd.s32 %s82, 1
    %s84 = scalar_select %p81, %s82, %s83
    %p87 = pneg %p81
    %p88 = scmp.eq.s32.totalorder %s8, 1
    %p89 = por %p87, %p88
    %p90 = scmp.ne.s32.totalorder %s82, %s85
    %p91 = scmp.eq.s32.totalorder %s8, 0
    %p92 = por %p90, %p91
    %p93 = scmp.ne.s32.totalorder %s82, %s85
    %p94 = scmp.eq.s32.totalorder %s13, 1
    %p95 = por %p93, %p94
    %p96 = scmp.ne.s32.totalorder %s85, %s86
    %p97 = scmp.eq.s32.totalorder %s13, 0
    %p98 = por %p96, %p97
    %p99 = scmp.ne.s32.totalorder %s85, %s86
    %p100 = scmp.eq.s32.totalorder %s14, 1
    %p101 = por %p99, %p100
    %p103 = scmp.ne.s32.totalorder %s86, %s102
    %p104 = scmp.eq.s32.totalorder %s14, 0
    %p105 = por %p103, %p104
    %p106 = scmp.le.s32.totalorder 1, %s8
    %p107 = scmp.lt.s32.totalorder %s8, 3
    %p108 = pnand %p106, %p107
    %p109 = pneg %p108
    // Predicated region
    $region9: #{tpu_custom_call.1} parent=5 // pred_check
      _
    $region10: #{tpu_custom_call.1} parent=5 // pred_check_branch
      %111 = sbr.rel (%p108) target = $region12
    $region11: #{tpu_custom_call.1} parent=5 // pred_region
      %s112 = ssub.s32 %s8, 1
      // Predicated region
      $region13: #{tpu_custom_call.1} parent=11 // pred_check
        %p113 = pneg %p72
      $region14: #{tpu_custom_call.1} parent=11 // pred_check_branch
        %115 = sbr.rel (%p113) target = $region16
      $region15: #{tpu_custom_call.1} parent=11 // pred_region
        %s116 = smul.u32 16, %s18
        %p117 = scmp.lt.s32.totalorder %s116, 15
        %s118 = scalar_select %p117, %s116, 15
        %s119 = smul.addr %s118, 8
        %s120 = scalar_lea.vmem %s1, %s119
        %s121 = smul.u32 16, %s18
      $region16: #{tpu_custom_call.1} parent=11 // pred_fallthru
        _
    $region12: #{tpu_custom_call.1} parent=5 // pred_fallthru
      _
    %p122 = scmp.lt.s32.totalorder %s8, 2
    // Predicated region
    $region17: #{tpu_custom_call.1} parent=5 // pred_check
      %p123 = pneg %p122
    $region18: #{tpu_custom_call.1} parent=5 // pred_check_branch
      %125 = sbr.rel (%p123) target = $region20
    $region19: #{tpu_custom_call.1} parent=5 // pred_region
      // Predicated region
      $region21: #{tpu_custom_call.1} parent=19 // pred_check
        %p126 = pneg %p40
      $region22: #{tpu_custom_call.1} parent=19 // pred_check_branch
        %128 = sbr.rel (%p126) target = $region24
      $region23: #{tpu_custom_call.1} parent=19 // pred_region
        %s129 = smul.u32 8, %s15
        %p130 = scmp.lt.s32.totalorder %s129, 15
        %s131 = scalar_select %p130, %s129, 15
        %s132 = smul.addr %s131, 8
        %s133 = scalar_lea.vmem %s0, %s132
        %s134 = smul.u32 8, %s15
      $region24: #{tpu_custom_call.1} parent=19 // pred_fallthru
        _
    $region20: #{tpu_custom_call.1} parent=5 // pred_fallthru
      _
    %p135 = scmp.le.s32.totalorder 1, %s8
    %p136 = scmp.lt.s32.totalorder %s8, 3
    %p137 = pnand %p135, %p136
    %p138 = pneg %p137
    // Predicated region
    $region25: #{tpu_custom_call.1} parent=5 // pred_check
      _
    $region26: #{tpu_custom_call.1} parent=5 // pred_check_branch
      %140 = sbr.rel (%p137) target = $region28
    $region27: #{tpu_custom_call.1} parent=5 // pred_region
      %s141 = ssub.s32 %s8, 1
      %s142 = smul.u32 8, %s17
      %p143 = scmp.lt.s32.totalorder %s142, 15
      %s144 = scalar_select %p143, %s142, 15
      %s145 = smul.addr %s144, 8
      %s146 = scalar_lea.vmem %s0, %s145
      %p147 = pneg %p46
      %p148 = pneg %p43
      %s149 = smul.u32 16, %s18
      %p150 = scmp.lt.s32.totalorder %s149, 15
      %s151 = scalar_select %p150, %s149, 15
      %s152 = smul.addr %s151, 8
      %s153 = scalar_lea.vmem %s1, %s152
      %p154 = pneg %p72
      %p155 = pneg %p69
      %p156 = pneg %p98
      %p157 = pneg %p95
      %s158 = smul.u32 8, %s17
      %p159 = scmp.lt.s32.totalorder %s158, 15
      %s160 = scalar_select %p159, %s158, 15
      %s161 = smul.addr %s160, 8
      %s162 = scalar_lea.vmem %s2, %s161
      %s163 = smul.u32 8, %s17
      %p164 = scmp.lt.s32.totalorder %s163, 15
      %s165 = scalar_select %p164, %s163, 15
      %s166 = smul.addr %s165, 8
      %s167 = scalar_lea.vmem %s0, %s166
      %s168 = smul.u32 8, %s17
      %s169 = smul.u32 16, %s18
      %p170 = scmp.lt.s32.totalorder %s169, 15
      %s171 = scalar_select %p170, %s169, 15
      %s172 = smul.addr %s171, 8
      %s173 = scalar_lea.vmem %s1, %s172
      %s174 = smul.u32 16, %s18
      %s175 = smul.u32 8, %s17
      %p176 = scmp.lt.s32.totalorder %s175, 15
      %s177 = scalar_select %p176, %s175, 15
      %s178 = smul.addr %s177, 8
      %s179 = scalar_lea.vmem %s2, %s178
      %s180 = smul.u32 8, %s17
      %p181 = scmp.eq.s32.totalorder %s18, 0
      // Predicated region
      $region29: #{tpu_custom_call.1} parent=27 // pred_check
        %p182 = pneg %p181
      $region30: #{tpu_custom_call.1} parent=27 // pred_check_branch
        %184 = sbr.rel (%p182) target = $region32
      $region31: #{tpu_custom_call.1} parent=27 // pred_region
        %vm185 = vcmask 7168
        %186 = vst.msk [vmem:[#allocation2] sm:$0xff] %vm185, 0.0
        %187 = vst.msk [vmem:[#allocation2 + $0x8] sm:$0xff] %vm185, 0.0
        %188 = vst.msk [vmem:[#allocation2 + $0x10] sm:$0xff] %vm185, 0.0
        %189 = vst.msk [vmem:[#allocation2 + $0x18] sm:$0xff] %vm185, 0.0
        %190 = vst.msk [vmem:[#allocation2 + $0x20] sm:$0xff] %vm185, 0.0
        %191 = vst.msk [vmem:[#allocation2 + $0x28] sm:$0xff] %vm185, 0.0
        %192 = vst.msk [vmem:[#allocation2 + $0x30] sm:$0xff] %vm185, 0.0
        %193 = vst.msk [vmem:[#allocation2 + $0x38] sm:$0xff] %vm185, 0.0
      $region32: #{tpu_custom_call.1} parent=27 // pred_fallthru
        _
      %v194 = vld [vmem:[%s167] sm:$0xff]
      %v195 = vld [vmem:[%s167 + $0x8] sm:$0xff]
      %v196 = vld [vmem:[%s167 + $0x10] sm:$0xff]
      %v197 = vld [vmem:[%s167 + $0x18] sm:$0xff]
      %v198 = vld [vmem:[%s167 + $0x20] sm:$0xff]
      %v199 = vld [vmem:[%s167 + $0x28] sm:$0xff]
      %v200 = vld [vmem:[%s167 + $0x30] sm:$0xff]
      %v201 = vld [vmem:[%s167 + $0x38] sm:$0xff]
      %v202 = vld [vmem:[%s173] sm:$0xff]
      %v203 = vld [vmem:[%s173 + $0x8] sm:$0xff]
      %v204 = vld [vmem:[%s173 + $0x10] sm:$0xff]
      %v205 = vld [vmem:[%s173 + $0x18] sm:$0xff]
      %v206 = vld [vmem:[%s173 + $0x20] sm:$0xff]
      %v207 = vld [vmem:[%s173 + $0x28] sm:$0xff]
      %v208 = vld [vmem:[%s173 + $0x30] sm:$0xff]
      %v209 = vld [vmem:[%s173 + $0x38] sm:$0xff]
      %v210 = vld [vmem:[%s173 + $0x40] sm:$0xff]
      %v211 = vld [vmem:[%s173 + $0x48] sm:$0xff]
      %v212 = vld [vmem:[%s173 + $0x50] sm:$0xff]
      %v213 = vld [vmem:[%s173 + $0x58] sm:$0xff]
      %v214 = vld [vmem:[%s173 + $0x60] sm:$0xff]
      %v215 = vld [vmem:[%s173 + $0x68] sm:$0xff]
      %v216 = vld [vmem:[%s173 + $0x70] sm:$0xff]
      %v217 = vld [vmem:[%s173 + $0x78] sm:$0xff]
      %vm218 = vcmask 261120
      %v220 = vsel %vm218, %v194, 0
      %v223 = vsel %vm218, %v195, 0
      %v226 = vsel %vm218, %v196, 0
      %v229 = vsel %vm218, %v197, 0
      %v232 = vsel %vm218, %v198, 0
      %v235 = vsel %vm218, %v199, 0
      %v238 = vsel %vm218, %v200, 0
      %v241 = vsel %vm218, %v201, 0
      %v244 = vsel %vm218, %v202, 0
      %v247 = vsel %vm218, %v203, 0
      %v250 = vsel %vm218, %v204, 0
      %v253 = vsel %vm218, %v205, 0
      %v256 = vsel %vm218, %v206, 0
      %v259 = vsel %vm218, %v207, 0
      %v262 = vsel %vm218, %v208, 0
      %v265 = vsel %vm218, %v209, 0
      %v268 = vsel %vm218, %v210, 0
      %v271 = vsel %vm218, %v211, 0
      %v274 = vsel %vm218, %v212, 0
      %v277 = vsel %vm218, %v213, 0
      %v280 = vsel %vm218, %v214, 0
      %v283 = vsel %vm218, %v215, 0
      %v286 = vsel %vm218, %v216, 0
      %v289 = vsel %vm218, %v217, 0
      %291 = vmatpush.xpose.msra.mxu0 %v289
      %292 = vmatpush.xpose.msra.mxu0 %v286
      %293 = vmatpush.xpose.msra.mxu0 %v283
      %294 = vmatpush.xpose.msra.mxu0 %v280
      %295 = vmatpush.xpose.msra.mxu0 %v277
      %296 = vmatpush.xpose.msra.mxu0 %v274
      %297 = vmatpush.xpose.msra.mxu0 %v271
      %298 = vmatpush.xpose.msra.mxu0 %v268
      %299 = vmatpush.xpose.msra.mxu0 %v265
      %300 = vmatpush.xpose.msra.mxu0 %v262
      %301 = vmatpush.xpose.msra.mxu0 %v259
      %302 = vmatpush.xpose.msra.mxu0 %v256
      %303 = vmatpush.xpose.msra.mxu0 %v253
      %304 = vmatpush.xpose.msra.mxu0 %v250
      %305 = vmatpush.xpose.msra.mxu0 %v247
      %306 = vmatpush.xpose.msra.mxu0 %v244
      %307 = vmatmul.f32.gmra.mxu0 %v220
      %v308 = vpop.f32.mrf.mxu0
      %v309 = vadd.f32 0.0, %v308
      %310 = vmatmul.f32.gmra.mxu0 %v223
      %v311 = vpop.f32.mrf.mxu0
      %v312 = vadd.f32 0.0, %v311
      %313 = vmatmul.f32.gmra.mxu0 %v226
      %v314 = vpop.f32.mrf.mxu0
      %v315 = vadd.f32 0.0, %v314
      %316 = vmatmul.f32.gmra.mxu0 %v229
      %v317 = vpop.f32.mrf.mxu0
      %v318 = vadd.f32 0.0, %v317
      %319 = vmatmul.f32.gmra.mxu0 %v232
      %v320 = vpop.f32.mrf.mxu0
      %v321 = vadd.f32 0.0, %v320
      %322 = vmatmul.f32.gmra.mxu0 %v235
      %v323 = vpop.f32.mrf.mxu0
      %v324 = vadd.f32 0.0, %v323
      %325 = vmatmul.f32.gmra.mxu0 %v238
      %v326 = vpop.f32.mrf.mxu0
      %v327 = vadd.f32 0.0, %v326
      %328 = vmatmul.f32.gmra.mxu0 %v241
      %v329 = vpop.f32.mrf.mxu0
      %v330 = vadd.f32 0.0, %v329
      %331 = vdwg.mxu0
      %v332 = vmul.f32 %v309, 1.442695
      %v333 = vpow.pop %v332
      %v334 = vmul.f32 %v312, 1.442695
      %v335 = vpow.pop %v334
      %v336 = vmul.f32 %v315, 1.442695
      %v337 = vpow.pop %v336
      %v338 = vmul.f32 %v318, 1.442695
      %v339 = vpow.pop %v338
      %v340 = vmul.f32 %v321, 1.442695
      %v341 = vpow.pop %v340
      %v342 = vmul.f32 %v324, 1.442695
      %v343 = vpow.pop %v342
      %v344 = vmul.f32 %v327, 1.442695
      %v345 = vpow.pop %v344
      %v346 = vmul.f32 %v330, 1.442695
      %v347 = vpow.pop %v346
      %v348 = vld [vmem:[#allocation2] sm:$0xff]
      %v349 = vld [vmem:[#allocation2 + $0x8] sm:$0xff]
      %v350 = vld [vmem:[#allocation2 + $0x10] sm:$0xff]
      %v351 = vld [vmem:[#allocation2 + $0x18] sm:$0xff]
      %v352 = vld [vmem:[#allocation2 + $0x20] sm:$0xff]
      %v353 = vld [vmem:[#allocation2 + $0x28] sm:$0xff]
      %v354 = vld [vmem:[#allocation2 + $0x30] sm:$0xff]
      %v355 = vld [vmem:[#allocation2 + $0x38] sm:$0xff]
      %v356 = vsub.f32 %v333, 7.389056
      %v357 = vsub.f32 %v335, 7.389056
      %v358 = vsub.f32 %v337, 7.389056
      %v359 = vsub.f32 %v339, 7.389056
      %v360 = vsub.f32 %v341, 7.389056
      %v361 = vsub.f32 %v343, 7.389056
      %v362 = vsub.f32 %v345, 7.389056
      %v363 = vsub.f32 %v347, 7.389056
      %v364 = vmul.f32 %v356, 1.442695
      %v365 = vpow.pop %v364
      %v366 = vmul.f32 %v357, 1.442695
      %v367 = vpow.pop %v366
      %v368 = vmul.f32 %v358, 1.442695
      %v369 = vpow.pop %v368
      %v370 = vmul.f32 %v359, 1.442695
      %v371 = vpow.pop %v370
      %v372 = vmul.f32 %v360, 1.442695
      %v373 = vpow.pop %v372
      %v374 = vmul.f32 %v361, 1.442695
      %v375 = vpow.pop %v374
      %v376 = vmul.f32 %v362, 1.442695
      %v377 = vpow.pop %v376
      %v378 = vmul.f32 %v363, 1.442695
      %v379 = vpow.pop %v378
      %380 = vadd.xlane.f32.xlu0 %v365
      %v381 = vpop.xlane.xlu0 %380
      %382 = vadd.xlane.f32.xlu0 %v367
      %v383 = vpop.xlane.xlu0 %382
      %384 = vadd.xlane.f32.xlu0 %v369
      %v385 = vpop.xlane.xlu0 %384
      %386 = vadd.xlane.f32.xlu0 %v371
      %v387 = vpop.xlane.xlu0 %386
      %388 = vadd.xlane.f32.xlu0 %v373
      %v389 = vpop.xlane.xlu0 %388
      %390 = vadd.xlane.f32.xlu0 %v375
      %v391 = vpop.xlane.xlu0 %390
      %392 = vadd.xlane.f32.xlu0 %v377
      %v393 = vpop.xlane.xlu0 %392
      %394 = vadd.xlane.f32.xlu0 %v379
      %v395 = vpop.xlane.xlu0 %394
      %v396 = vadd.f32 %v348, %v381
      %v397 = vadd.f32 %v349, %v383
      %v398 = vadd.f32 %v350, %v385
      %v399 = vadd.f32 %v351, %v387
      %v400 = vadd.f32 %v352, %v389
      %v401 = vadd.f32 %v353, %v391
      %v402 = vadd.f32 %v354, %v393
      %v403 = vadd.f32 %v355, %v395
      %vm404 = vcmask 7168
      %405 = vst.msk [vmem:[#allocation2] sm:$0xff] %vm404, %v396
      %406 = vst.msk [vmem:[#allocation2 + $0x8] sm:$0xff] %vm404, %v397
      %407 = vst.msk [vmem:[#allocation2 + $0x10] sm:$0xff] %vm404, %v398
      %408 = vst.msk [vmem:[#allocation2 + $0x18] sm:$0xff] %vm404, %v399
      %409 = vst.msk [vmem:[#allocation2 + $0x20] sm:$0xff] %vm404, %v400
      %410 = vst.msk [vmem:[#allocation2 + $0x28] sm:$0xff] %vm404, %v401
      %411 = vst.msk [vmem:[#allocation2 + $0x30] sm:$0xff] %vm404, %v402
      %412 = vst.msk [vmem:[#allocation2 + $0x38] sm:$0xff] %vm404, %v403
      // Predicated region
      $region33: #{tpu_custom_call.1} parent=27 // pred_check
        %p413 = pneg %p181
      $region34: #{tpu_custom_call.1} parent=27 // pred_check_branch
        %415 = sbr.rel (%p413) target = $region36
      $region35: #{tpu_custom_call.1} parent=27 // pred_region
        %v416 = vld [vmem:[#allocation2] sm:$0xff]
        %v417 = vld [vmem:[#allocation2 + $0x8] sm:$0xff]
        %v418 = vld [vmem:[#allocation2 + $0x10] sm:$0xff]
        %v419 = vld [vmem:[#allocation2 + $0x18] sm:$0xff]
        %v420 = vld [vmem:[#allocation2 + $0x20] sm:$0xff]
        %v421 = vld [vmem:[#allocation2 + $0x28] sm:$0xff]
        %v422 = vld [vmem:[#allocation2 + $0x30] sm:$0xff]
        %v423 = vld [vmem:[#allocation2 + $0x38] sm:$0xff]
        %v424 = vsub.f32 %v416, 1.0
        %v425 = vsub.f32 %v417, 1.0
        %v426 = vsub.f32 %v418, 1.0
        %v427 = vsub.f32 %v419, 1.0
        %v428 = vsub.f32 %v420, 1.0
        %v429 = vsub.f32 %v421, 1.0
        %v430 = vsub.f32 %v422, 1.0
        %v431 = vsub.f32 %v423, 1.0
        %v432 = vlog2.pop %v424
        %v433 = vmul.f32 %v432, 0.6931472
        %v434 = vlog2.pop %v425
        %v435 = vmul.f32 %v434, 0.6931472
        %v436 = vlog2.pop %v426
        %v437 = vmul.f32 %v436, 0.6931472
        %v438 = vlog2.pop %v427
        %v439 = vmul.f32 %v438, 0.6931472
        %v440 = vlog2.pop %v428
        %v441 = vmul.f32 %v440, 0.6931472
        %v442 = vlog2.pop %v429
        %v443 = vmul.f32 %v442, 0.6931472
        %v444 = vlog2.pop %v430
        %v445 = vmul.f32 %v444, 0.6931472
        %v446 = vlog2.pop %v431
        %v447 = vmul.f32 %v446, 0.6931472
        %v448 = vadd.f32 %v433, 7.389056
        %v449 = vadd.f32 %v435, 7.389056
        %v450 = vadd.f32 %v437, 7.389056
        %v451 = vadd.f32 %v439, 7.389056
        %v452 = vadd.f32 %v441, 7.389056
        %v453 = vadd.f32 %v443, 7.389056
        %v454 = vadd.f32 %v445, 7.389056
        %v455 = vadd.f32 %v447, 7.389056
        %456 = vst.msk [vmem:[%s179] sm:$0xff] %vm404, %v448
        %457 = vst.msk [vmem:[%s179 + $0x8] sm:$0xff] %vm404, %v449
        %458 = vst.msk [vmem:[%s179 + $0x10] sm:$0xff] %vm404, %v450
        %459 = vst.msk [vmem:[%s179 + $0x18] sm:$0xff] %vm404, %v451
        %460 = vst.msk [vmem:[%s179 + $0x20] sm:$0xff] %vm404, %v452
        %461 = vst.msk [vmem:[%s179 + $0x28] sm:$0xff] %vm404, %v453
        %462 = vst.msk [vmem:[%s179 + $0x30] sm:$0xff] %vm404, %v454
        %463 = vst.msk [vmem:[%s179 + $0x38] sm:$0xff] %vm404, %v455
      $region36: #{tpu_custom_call.1} parent=27 // pred_fallthru
        _
      %s464 = smul.u32 8, %s17
      %p465 = scmp.lt.s32.totalorder %s464, 15
      %s466 = scalar_select %p465, %s464, 15
      %s467 = smul.addr %s466, 8
      %s468 = scalar_lea.vmem %s2, %s467
      // Predicated region
      $region37: #{tpu_custom_call.1} parent=27 // pred_check
        %p469 = pneg %p95
      $region38: #{tpu_custom_call.1} parent=27 // pred_check_branch
        %471 = sbr.rel (%p469) target = $region40
      $region39: #{tpu_custom_call.1} parent=27 // pred_region
        %s472 = smul.u32 8, %s17
      $region40: #{tpu_custom_call.1} parent=27 // pred_fallthru
        _
    $region28: #{tpu_custom_call.1} parent=5 // pred_fallthru
      _
    %p473 = scmp.le.s32.totalorder 2, %s8
    // Predicated region
    $region41: #{tpu_custom_call.1} parent=5 // pred_check
      %p474 = pneg %p473
    $region42: #{tpu_custom_call.1} parent=5 // pred_check_branch
      %476 = sbr.rel (%p474) target = $region44
    $region43: #{tpu_custom_call.1} parent=5 // pred_region
      %s477 = ssub.s32 %s8, 2
      // Predicated region
      $region45: #{tpu_custom_call.1} parent=43 // pred_check
        %p478 = pneg %p101
      $region46: #{tpu_custom_call.1} parent=43 // pred_check_branch
        %480 = sbr.rel (%p478) target = $region48
      $region47: #{tpu_custom_call.1} parent=43 // pred_region
        %s481 = smul.u32 8, %s19
        %p482 = scmp.lt.s32.totalorder %s481, 15
        %s483 = scalar_select %p482, %s481, 15
        %s484 = smul.addr %s483, 8
        %s485 = scalar_lea.vmem %s2, %s484
      $region48: #{tpu_custom_call.1} parent=43 // pred_fallthru
        _
    $region44: #{tpu_custom_call.1} parent=5 // pred_fallthru
      _
  $region6: #{tpu_custom_call.1} parent=0 // loop_footer
    %s12 = sadd.s32 1, %s8
  $region7: #{tpu_custom_call.1} parent=0 // loop_footer_branch
    %7 = sbr.rel target = $region3
  $region8: #{tpu_custom_call.1} parent=0 // loop_exit
    _

</llo_original>
